<compile_context>
chip_gen: v7x
topology: tpu7x:2x2x1
jax: 0.10.0
libtpu: 0.0.40
codegen_flags: <defaults>
</compile_context>

<pallas_src>
import functools

import jax
import jax.numpy as jnp
from jax import lax
from jax.experimental import pallas as pl
from jax.experimental.pallas import tpu as pltpu

SUBLANE = 8    # f32 sublane tile
LANE = 128     # lane width


def _round_up(n, m):
    return ((n + m - 1) // m) * m


# ----------------------------------------------------------------------------
# Kernel: T RNN steps + decoder in ONE pallas_call.
#   grid = (T,), sequential ("arbitrary"); h_scratch carries the hidden slab.
#   per step t:
#     xh    = x_t_slab + h_scratch            # row0 = [x_t | h_{t-1} | 1.0]
#     h_new = tanh(xh @ W_comb)               # b_ih+b_hh folded into row k_bias
#     out_t = h_new @ W_dec                   # b_dec    folded into row k_bias
#   W_comb writes onto columns [input_size, input_size+hidden_size) so h_new
#   is already positioned as the "h" block of the next step's slab.
# ----------------------------------------------------------------------------
def rnn_seq_kernel(h0_ref, x_ref, wcomb_ref, wdec_ref,
                   out_ref, hout_ref, h_scratch, *, k_bias):
    t = pl.program_id(0)

    @pl.when(t == 0)
    def _():
        h_scratch[...] = h0_ref[...]

    xh = x_ref[0] + h_scratch[...]                          # (SUBLANE, K_pad)
    pre = jnp.dot(xh, wcomb_ref[...], preferred_element_type=jnp.float32)
    h_new = jnp.tanh(pre)

    # Re-arm the constant-1 bias lane on row 0 only; padded rows/lanes stay 0.
    row = lax.broadcasted_iota(jnp.int32, h_new.shape, 0)
    lane = lax.broadcasted_iota(jnp.int32, h_new.shape, 1)
    h_new = jnp.where((row == 0) & (lane == k_bias), 1.0, h_new)

    h_scratch[...] = h_new
    hout_ref[...] = h_new        # resident output block; flushed once at the end

    out_ref[0] = jnp.dot(h_new, wdec_ref[...],
                         preferred_element_type=jnp.float32)


def _build_seq_call(T, K_pad, O_pad, k_bias):
    kernel = functools.partial(rnn_seq_kernel, k_bias=k_bias)
    return pl.pallas_call(
        kernel,
        out_shape=(jax.ShapeDtypeStruct((T, SUBLANE, O_pad), jnp.float32),
                   jax.ShapeDtypeStruct((SUBLANE, K_pad), jnp.float32)),
        grid_spec=pltpu.PrefetchScalarGridSpec(
            num_scalar_prefetch=0,
            grid=(T,),
            in_specs=[
                pl.BlockSpec((SUBLANE, K_pad), lambda t: (0, 0)),        # h0 slab
                pl.BlockSpec((1, SUBLANE, K_pad), lambda t: (t, 0, 0)),  # x_t slabs
                pl.BlockSpec((K_pad, K_pad), lambda t: (0, 0)),          # W_comb (resident)
                pl.BlockSpec((K_pad, O_pad), lambda t: (0, 0)),          # W_dec  (resident)
            ],
            out_specs=(
                pl.BlockSpec((1, SUBLANE, O_pad), lambda t: (t, 0, 0)),  # per-step output
                pl.BlockSpec((SUBLANE, K_pad), lambda t: (0, 0)),        # final hidden slab
            ),
            scratch_shapes=[pltpu.VMEM((SUBLANE, K_pad), jnp.float32)],
        ),
        compiler_params=pltpu.CompilerParams(
            dimension_semantics=("arbitrary",)),
    )


# ----------------------------------------------------------------------------
# One-time packing of the PyTorch-shaped params (done outside forward).
# ----------------------------------------------------------------------------
def pack_params(params):
    w_ih, w_hh, b_ih, b_hh, w_dec, b_dec = params
    hidden_size, input_size = w_ih.shape
    output_size = w_dec.shape[0]

    K = input_size + hidden_size            # logical [x | h] width
    k_bias = K                              # lane carrying the constant 1.0
    K_pad = _round_up(max(K + 1, LANE), LANE)
    O_pad = _round_up(max(output_size, LANE), LANE)

    # Fused recurrent weight; output columns placed at [input_size, K) so the
    # tanh result is already laid out as the next step's "h" lanes.
    w_comb = jnp.zeros((K_pad, K_pad), jnp.float32)
    w_comb = w_comb.at[:input_size, input_size:K].set(w_ih.T.astype(jnp.float32))
    w_comb = w_comb.at[input_size:K, input_size:K].set(w_hh.T.astype(jnp.float32))
    w_comb = w_comb.at[k_bias, input_size:K].set((b_ih + b_hh).astype(jnp.float32))

    # Decoder weight with its bias folded into the bias-lane row.
    w_dec_p = jnp.zeros((K_pad, O_pad), jnp.float32)
    w_dec_p = w_dec_p.at[input_size:K, :output_size].set(w_dec.T.astype(jnp.float32))
    w_dec_p = w_dec_p.at[k_bias, :output_size].set(b_dec.astype(jnp.float32))

    dims = (input_size, hidden_size, output_size, K_pad, O_pad, k_bias)
    return (w_comb, w_dec_p), dims


def make_rnn(params):
    """Returns (forward, forward_seq) jitted callables.

    forward(x, hidden)        -> (output (1,1,O), hidden (1,1,H))    [module API]
    forward_seq(xs, hidden)   -> (outputs (T,O), hidden (1,1,H))     [T steps, one kernel]
    """
    (w_comb, w_dec_p), dims = pack_params(params)
    input_size, hidden_size, output_size, K_pad, O_pad, k_bias = dims

    def _forward_seq_impl(xs, hidden):
        T = xs.shape[0]
        x_slabs = jnp.zeros((T, SUBLANE, K_pad), jnp.float32)
        x_slabs = x_slabs.at[:, 0, :input_size].set(
            xs.reshape(T, input_size).astype(jnp.float32))

        h0 = jnp.zeros((SUBLANE, K_pad), jnp.float32)
        h0 = h0.at[0, input_size:input_size + hidden_size].set(
            hidden.reshape(hidden_size).astype(jnp.float32))
        h0 = h0.at[0, k_bias].set(1.0)

        out_p, hout_p = _build_seq_call(T, K_pad, O_pad, k_bias)(
            h0, x_slabs, w_comb, w_dec_p)

        outputs = out_p[:, 0, :output_size]
        hidden_new = hout_p[0, input_size:input_size + hidden_size].reshape(
            1, 1, hidden_size)
        return outputs, hidden_new

    def _forward_impl(x, hidden):
        outputs, hidden_new = _forward_seq_impl(
            x.reshape(1, input_size), hidden)
        return outputs.reshape(1, 1, output_size), hidden_new

    return jax.jit(_forward_impl), jax.jit(_forward_seq_impl)


# ----------------------------------------------------------------------------
# Deterministic init matching nn.RNN / nn.Linear shapes, and pure-JAX reference.
# ----------------------------------------------------------------------------
def init_params(key, input_size, hidden_size, output_size):
    k = 1.0 / jnp.sqrt(jnp.float32(hidden_size))
    keys = jax.random.split(key, 6)
    w_ih = jax.random.uniform(keys[0], (hidden_size, input_size), jnp.float32, -k, k)
    w_hh = jax.random.uniform(keys[1], (hidden_size, hidden_size), jnp.float32, -k, k)
    b_ih = jax.random.uniform(keys[2], (hidden_size,), jnp.float32, -k, k)
    b_hh = jax.random.uniform(keys[3], (hidden_size,), jnp.float32, -k, k)
    w_dec = jax.random.uniform(keys[4], (output_size, hidden_size), jnp.float32, -k, k)
    b_dec = jax.random.uniform(keys[5], (output_size,), jnp.float32, -k, k)
    return (w_ih, w_hh, b_ih, b_hh, w_dec, b_dec)


def rnn_forward_ref(x, hidden, params):
    """Pure-JAX reference of the PyTorch forward (one step)."""
    w_ih, w_hh, b_ih, b_hh, w_dec, b_dec = params
    input_size = w_ih.shape[1]
    x2 = x.reshape(1, input_size)
    h2 = hidden.reshape(1, -1)
    h_new = jnp.tanh(x2 @ w_ih.T + b_ih + h2 @ w_hh.T + b_hh)
    out = h_new @ w_dec.T + b_dec
    return out.reshape(1, 1, -1), h_new.reshape(1, 1, -1)


if __name__ == "__main__":
    input_size, hidden_size, output_size = 16, 32, 8

    key = jax.random.PRNGKey(0)
    k_params, k_x = jax.random.split(key)
    params = init_params(k_params, input_size, hidden_size, output_size)
    forward, forward_seq = make_rnn(params)

    T = 8
    xs = jax.random.normal(k_x, (T, input_size), jnp.float32)
    hidden0 = jnp.zeros((1, 1, hidden_size), jnp.float32)   # init_hidden()

    # ---- single-step module API (forward(input, hidden)), chained twice ----
    out_a, h_a = forward(xs[0], hidden0)
    out_b, h_b = forward(xs[1], h_a)
    out_b = jax.block_until_ready(out_b)
    h_b = jax.block_until_ready(h_b)

    out_a_ref, h_a_ref = rnn_forward_ref(xs[0], hidden0, params)
    out_b_ref, h_b_ref = rnn_forward_ref(xs[1], h_a_ref, params)

    assert out_a.shape == (1, 1, output_size)
    assert h_a.shape == (1, 1, hidden_size)
    assert jnp.allclose(out_a, out_a_ref, atol=1e-5, rtol=1e-5)
    assert jnp.allclose(h_a, h_a_ref, atol=1e-5, rtol=1e-5)
    assert jnp.allclose(out_b, out_b_ref, atol=1e-5, rtol=1e-5)
    assert jnp.allclose(h_b, h_b_ref, atol=1e-5, rtol=1e-5)

    # ---- multi-step path: whole sequence in ONE pallas_call ----
    outs_seq, h_seq = forward_seq(xs, hidden0)
    outs_seq = jax.block_until_ready(outs_seq)
    h_seq = jax.block_until_ready(h_seq)

    h_ref = hidden0
    outs_ref = []
    for t in range(T):
        o_ref, h_ref = rnn_forward_ref(xs[t], h_ref, params)
        outs_ref.append(o_ref.reshape(output_size))
    outs_ref = jnp.stack(outs_ref)

    assert outs_seq.shape == (T, output_size)
    assert h_seq.shape == (1, 1, hidden_size)
    assert jnp.allclose(outs_seq, outs_ref, atol=1e-4, rtol=1e-4)
    assert jnp.allclose(h_seq.reshape(-1), h_ref.reshape(-1), atol=1e-4, rtol=1e-4)

    print("KERNEL_OK")
</pallas_src>

<mosaic_0001>
module attributes {stable_mosaic.version = 11 : i64} {
  func.func @rnn_seq_kernel(%arg0: i32, %arg1: memref<8x128xf32, #tpu.memory_space<vmem>>, %arg2: memref<1x8x128xf32, #tpu.memory_space<vmem>>, %arg3: memref<128x128xf32, #tpu.memory_space<vmem>>, %arg4: memref<128x128xf32, #tpu.memory_space<vmem>>, %arg5: memref<1x8x128xf32, #tpu.memory_space<vmem>>, %arg6: memref<8x128xf32, #tpu.memory_space<vmem>>, %arg7: memref<8x128xf32, #tpu.memory_space<vmem>>) attributes {dimension_semantics = [#tpu.dimension_semantics<arbitrary>], iteration_bounds = array<i64: 1>, scalar_prefetch = 0 : i64, scratch_operands = 1 : i64, tpu.core_type = #tpu.core_type<tc>, window_params = [{pipeline_mode = #tpu.pipeline_mode<synchronous>, transform_indices = @transform_0, window_bounds = array<i64: 8, 128>}, {transform_indices = @transform_1, window_bounds = array<i64: 1, 8, 128>}, {pipeline_mode = #tpu.pipeline_mode<synchronous>, transform_indices = @transform_2, window_bounds = array<i64: 128, 128>}, {pipeline_mode = #tpu.pipeline_mode<synchronous>, transform_indices = @transform_3, window_bounds = array<i64: 128, 128>}, {transform_indices = @transform_4, window_bounds = array<i64: 1, 8, 128>}, {pipeline_mode = #tpu.pipeline_mode<synchronous>, transform_indices = @transform_5, window_bounds = array<i64: 8, 128>}]} {
    %c0_i32 = arith.constant 0 : i32
    %0 = arith.cmpi eq, %arg0, %c0_i32 : i32
    %1 = arith.extui %0 : i1 to i32
    %c0_i32_0 = arith.constant 0 : i32
    %2 = arith.cmpi ne, %1, %c0_i32_0 : i32
    scf.if %2 {
      %c0_19 = arith.constant 0 : index
      %c0_20 = arith.constant 0 : index
      %26 = vector.load %arg1[%c0_19, %c0_20] : memref<8x128xf32, #tpu.memory_space<vmem>>, vector<8x128xf32>
      %c0_21 = arith.constant 0 : index
      %c0_22 = arith.constant 0 : index
      %27 = vector.load %arg7[%c0_21, %c0_22] : memref<8x128xf32, #tpu.memory_space<vmem>>, vector<8x128xf32>
      tpu.vector_store %arg7[%c0_21, %c0_22], %26 {strides = array<i32>} : memref<8x128xf32, #tpu.memory_space<vmem>>, vector<8x128xf32>,
    } else {
    }
    %c0 = arith.constant 0 : index
    %c0_1 = arith.constant 0 : index
    %c0_2 = arith.constant 0 : index
    %3 = vector.load %arg2[%c0, %c0_1, %c0_2] : memref<1x8x128xf32, #tpu.memory_space<vmem>>, vector<1x8x128xf32>
    %4 = vector.shape_cast %3 : vector<1x8x128xf32> to vector<8x128xf32>
    %c0_3 = arith.constant 0 : index
    %c0_4 = arith.constant 0 : index
    %5 = vector.load %arg7[%c0_3, %c0_4] : memref<8x128xf32, #tpu.memory_space<vmem>>, vector<8x128xf32>
    %6 = arith.addf %4, %5 : vector<8x128xf32>
    %c0_5 = arith.constant 0 : index
    %c0_6 = arith.constant 0 : index
    %7 = vector.load %arg3[%c0_5, %c0_6] : memref<128x128xf32, #tpu.memory_space<vmem>>, vector<128x128xf32>
    %cst = arith.constant dense<0.000000e+00> : vector<8x128xf32>
    %8 = tpu.matmul %6, %7, %cst {dimension_numbers = #tpu.dot_dimension_numbers<[1], [0], [0], [1], [0, 0, 1, 1], [], []>} : vector<8x128xf32>, vector<128x128xf32>, vector<8x128xf32> -> vector<8x128xf32>
    %9 = math.tanh %8 : vector<8x128xf32>
    %10 = tpu.iota {dimensions = array<i32: 0>} : vector<8x128xi32>
    %11 = tpu.iota {dimensions = array<i32: 1>} : vector<8x128xi32>
    %c0_i32_7 = arith.constant 0 : i32
    %12 = vector.broadcast %c0_i32_7 : i32 to vector<8x128xi32>
    %13 = arith.cmpi eq, %10, %12 : vector<8x128xi32>
    %c48_i32 = arith.constant 48 : i32
    %14 = vector.broadcast %c48_i32 : i32 to vector<8x128xi32>
    %15 = arith.cmpi eq, %11, %14 : vector<8x128xi32>
    %16 = arith.andi %13, %15 : vector<8x128xi1>
    %cst_8 = arith.constant 1.000000e+00 : f32
    %17 = vector.broadcast %cst_8 : f32 to vector<8x128xf32>
    %18 = arith.select %16, %17, %9 : vector<8x128xi1>, vector<8x128xf32>
    %c0_9 = arith.constant 0 : index
    %c0_10 = arith.constant 0 : index
    %19 = vector.load %arg7[%c0_9, %c0_10] : memref<8x128xf32, #tpu.memory_space<vmem>>, vector<8x128xf32>
    tpu.vector_store %arg7[%c0_9, %c0_10], %18 {strides = array<i32>} : memref<8x128xf32, #tpu.memory_space<vmem>>, vector<8x128xf32>,
    %c0_11 = arith.constant 0 : index
    %c0_12 = arith.constant 0 : index
    %20 = vector.load %arg6[%c0_11, %c0_12] : memref<8x128xf32, #tpu.memory_space<vmem>>, vector<8x128xf32>
    tpu.vector_store %arg6[%c0_11, %c0_12], %18 {strides = array<i32>} : memref<8x128xf32, #tpu.memory_space<vmem>>, vector<8x128xf32>,
    %c0_13 = arith.constant 0 : index
    %c0_14 = arith.constant 0 : index
    %21 = vector.load %arg4[%c0_13, %c0_14] : memref<128x128xf32, #tpu.memory_space<vmem>>, vector<128x128xf32>
    %cst_15 = arith.constant dense<0.000000e+00> : vector<8x128xf32>
    %22 = tpu.matmul %18, %21, %cst_15 {dimension_numbers = #tpu.dot_dimension_numbers<[1], [0], [0], [1], [0, 0, 1, 1], [], []>} : vector<8x128xf32>, vector<128x128xf32>, vector<8x128xf32> -> vector<8x128xf32>
    %c0_16 = arith.constant 0 : index
    %c0_17 = arith.constant 0 : index
    %c0_18 = arith.constant 0 : index
    %23 = vector.load %arg5[%c0_16, %c0_17, %c0_18] : memref<1x8x128xf32, #tpu.memory_space<vmem>>, vector<1x8x128xf32>
    %24 = vector.shape_cast %23 : vector<1x8x128xf32> to vector<8x128xf32>
    %25 = vector.shape_cast %22 : vector<8x128xf32> to vector<1x8x128xf32>
    tpu.vector_store %arg5[%c0_16, %c0_17, %c0_18], %25 {strides = array<i32>} : memref<1x8x128xf32, #tpu.memory_space<vmem>>, vector<1x8x128xf32>,
    return
  }
  func.func @transform_0(%arg0: i32) -> (i32, i32) {
    %c0_i32 = arith.constant 0 : i32
    %c0_i32_0 = arith.constant 0 : i32
    %c0_i32_1 = arith.constant 0 : i32
    return %c0_i32, %c0_i32_0 : i32, i32
  }
  func.func @transform_1(%arg0: i32) -> (i32, i32, i32) {
    %c0_i32 = arith.constant 0 : i32
    %c0_i32_0 = arith.constant 0 : i32
    %c0_i32_1 = arith.constant 0 : i32
    return %arg0, %c0_i32, %c0_i32_0 : i32, i32, i32
  }
  func.func @transform_2(%arg0: i32) -> (i32, i32) {
    %c0_i32 = arith.constant 0 : i32
    %c0_i32_0 = arith.constant 0 : i32
    %c0_i32_1 = arith.constant 0 : i32
    return %c0_i32, %c0_i32_0 : i32, i32
  }
  func.func @transform_3(%arg0: i32) -> (i32, i32) {
    %c0_i32 = arith.constant 0 : i32
    %c0_i32_0 = arith.constant 0 : i32
    %c0_i32_1 = arith.constant 0 : i32
    return %c0_i32, %c0_i32_0 : i32, i32
  }
  func.func @transform_4(%arg0: i32) -> (i32, i32, i32) {
    %c0_i32 = arith.constant 0 : i32
    %c0_i32_0 = arith.constant 0 : i32
    %c0_i32_1 = arith.constant 0 : i32
    return %arg0, %c0_i32, %c0_i32_0 : i32, i32, i32
  }
  func.func @transform_5(%arg0: i32) -> (i32, i32) {
    %c0_i32 = arith.constant 0 : i32
    %c0_i32_0 = arith.constant 0 : i32
    %c0_i32_1 = arith.constant 0 : i32
    return %c0_i32, %c0_i32_0 : i32, i32
  }
}

</mosaic_0001>

<llo_original>
// kernel: _forward_impl.1
$region0: #{_forward_impl.1}
  #allocation0 [shape = 'u32[]', space=smem, size = 0x4, offset = 0x4, fixed_abs, tag = 'smem constant byte address 0x4 - core index']
  #allocation1 [shape = 'u32[144,128]{1,0:T(1,128)}', space=vmem, size = 0x12000, scoped, tag = 'internal scratch']
  #allocation2 [shape = 'f32[8,128]{1,0:T(8,128)}', space=vmem, size = 0x1000, scoped, tag = 'scratch operand']
  %s0 = inlined_call_operand.vmem [shape: f32[8,128], index: 0, kind: input, shape index: {}]
  %s1 = inlined_call_operand.vmem [shape: f32[1,8,128], index: 1, kind: input, shape index: {}]
  %s2 = inlined_call_operand.hbm [shape: f32[128,128], index: 2, kind: input, shape index: {}]
  %s3 = inlined_call_operand.hbm [shape: f32[128,128], index: 3, kind: input, shape index: {}]
  %s4 = inlined_call_operand.vmem [shape: f32[1,8,128], index: 4, kind: output, shape index: {0}]
  %s5 = inlined_call_operand.vmem [shape: f32[8,128], index: 5, kind: output, shape index: {1}]
  %6 = xla_tuple %s4, %s5
  %s7 = sld [smem:[#allocation0]]
  $region46: #{_forward_impl.1} parent=0
    _
  %s9 = ssub.s32 1, %s7
  %s10 = scalar_select 0, %s9, %s7
  $region1: #{_forward_impl.1} parent=0
    #allocation3 [shape = 'u8[65536]{0}', space=vmem, size = 0x10000, scoped, tag = 'input window, operand 2, single buffered']
    #allocation4 [shape = 's32[1]{0}', space=sflag, size = 0x4, scoped, tag = 'scoped memory for _forward_impl.1']
    #allocation5 [shape = 'u8[65536]{0}', space=vmem, size = 0x10000, scoped, tag = 'input window, operand 3, single buffered']
    #allocation6 [shape = 's32[1]{0}', space=sflag, size = 0x4, scoped, tag = 'scoped memory for _forward_impl.1']
    %11 = vsyncpa [#allocation4], 0
    %12 = vsyncpa [#allocation6], 0
    // Predicated region
    $region2: #{_forward_impl.1} parent=1 // pred_check
      _
    $region3: #{_forward_impl.1} parent=1 // pred_check_branch
      %14 = sbr.rel (0) target = $region5
    $region4: #{_forward_impl.1} parent=1 // pred_region
      _
    $region5: #{_forward_impl.1} parent=1 // pred_fallthru
      _
    // Predicated region
    $region6: #{_forward_impl.1} parent=1 // pred_check
      _
    $region7: #{_forward_impl.1} parent=1 // pred_check_branch
      %16 = sbr.rel (0) target = $region9
    $region8: #{_forward_impl.1} parent=1 // pred_region
      _
    $region9: #{_forward_impl.1} parent=1 // pred_fallthru
      _
    // Predicated region
    $region10: #{_forward_impl.1} parent=1 // pred_check
      _
    $region11: #{_forward_impl.1} parent=1 // pred_check_branch
      %18 = sbr.rel (0) target = $region13
    $region12: #{_forward_impl.1} parent=1 // pred_region
      %s20 = ssub.s32 2048, 2048
      %21 = vsyncadd [#allocation4], %s20
      %s22 = sshll.u32 [#allocation3], 4
      %s23 = int_to_ptr.vmem [resolvable:$true] %s22
      %28 = dma.hbm_to_vmem [thread:$0]  %s2, 2048, %s23, [#allocation4], 128, 128, 8
    $region13: #{_forward_impl.1} parent=1 // pred_fallthru
      _
    // Predicated region
    $region14: #{_forward_impl.1} parent=1 // pred_check
      _
    $region15: #{_forward_impl.1} parent=1 // pred_check_branch
      %30 = sbr.rel (0) target = $region17
    $region16: #{_forward_impl.1} parent=1 // pred_region
      %s32 = ssub.s32 2048, 2048
      %33 = vsyncadd [#allocation6], %s32
      %s34 = sshll.u32 [#allocation5], 4
      %s35 = int_to_ptr.vmem [resolvable:$true] %s34
      %40 = dma.hbm_to_vmem [thread:$0]  %s3, 2048, %s35, [#allocation6], 128, 128, 8
    $region17: #{_forward_impl.1} parent=1 // pred_fallthru
      _
    // Predicated region
    $region18: #{_forward_impl.1} parent=1 // pred_check
      _
    $region19: #{_forward_impl.1} parent=1 // pred_check_branch
      %42 = sbr.rel (0) target = $region21
    $region20: #{_forward_impl.1} parent=1 // pred_region
      %43 = dma.done [#allocation4], 2048
    $region21: #{_forward_impl.1} parent=1 // pred_fallthru
      _
    // Predicated region
    $region22: #{_forward_impl.1} parent=1 // pred_check
      _
    $region23: #{_forward_impl.1} parent=1 // pred_check_branch
      %45 = sbr.rel (0) target = $region25
    $region24: #{_forward_impl.1} parent=1 // pred_region
      %46 = dma.done [#allocation6], 2048
    $region25: #{_forward_impl.1} parent=1 // pred_fallthru
      _
    %p47 = scmp.eq.s32.totalorder 0, 0
    // Predicated region
    $region26: #{_forward_impl.1} parent=1 // pred_check
      %p48 = pneg %p47
    $region27: #{_forward_impl.1} parent=1 // pred_check_branch
      %50 = sbr.rel (%p48) target = $region29
    $region28: #{_forward_impl.1} parent=1 // pred_region
      %v51 = vld [vmem:[%s0] sm:$0xff]
      %52 = vst [vmem:[#allocation2] sm:$0xff] %v51
    $region29: #{_forward_impl.1} parent=1 // pred_fallthru
      _
    %v53 = vld [vmem:[%s1] sm:$0xff]
    %v54 = vld [vmem:[#allocation2] sm:$0xff]
    %v55 = vadd.f32 %v53, %v54
    %v56 = vld [vmem:[#allocation3] sm:$0xff]
    %v57 = vld [vmem:[#allocation3 + $0x8] sm:$0xff]
    %v58 = vld [vmem:[#allocation3 + $0x10] sm:$0xff]
    %v59 = vld [vmem:[#allocation3 + $0x18] sm:$0xff]
    %v60 = vld [vmem:[#allocation3 + $0x20] sm:$0xff]
    %v61 = vld [vmem:[#allocation3 + $0x28] sm:$0xff]
    %v62 = vld [vmem:[#allocation3 + $0x30] sm:$0xff]
    %v63 = vld [vmem:[#allocation3 + $0x38] sm:$0xff]
    %v64 = vld [vmem:[#allocation3 + $0x40] sm:$0xff]
    %v65 = vld [vmem:[#allocation3 + $0x48] sm:$0xff]
    %v66 = vld [vmem:[#allocation3 + $0x50] sm:$0xff]
    %v67 = vld [vmem:[#allocation3 + $0x58] sm:$0xff]
    %v68 = vld [vmem:[#allocation3 + $0x60] sm:$0xff]
    %v69 = vld [vmem:[#allocation3 + $0x68] sm:$0xff]
    %v70 = vld [vmem:[#allocation3 + $0x70] sm:$0xff]
    %v71 = vld [vmem:[#allocation3 + $0x78] sm:$0xff]
    %72 = vmatprep.subr.mxu0 0.0
    %73 = vmatpush1.msra.mxu0 %v56
    %74 = vmatprep.subr.mxu0 0.0
    %75 = vmatpush1.msra.mxu0 %v57
    %76 = vmatprep.subr.mxu0 0.0
    %77 = vmatpush1.msra.mxu0 %v58
    %78 = vmatprep.subr.mxu0 0.0
    %79 = vmatpush1.msra.mxu0 %v59
    %80 = vmatprep.subr.mxu0 0.0
    %81 = vmatpush1.msra.mxu0 %v60
    %82 = vmatprep.subr.mxu0 0.0
    %83 = vmatpush1.msra.mxu0 %v61
    %84 = vmatprep.subr.mxu0 0.0
    %85 = vmatpush1.msra.mxu0 %v62
    %86 = vmatprep.subr.mxu0 0.0
    %87 = vmatpush1.msra.mxu0 %v63
    %88 = vmatprep.subr.mxu0 0.0
    %89 = vmatpush1.msra.mxu0 %v64
    %90 = vmatprep.subr.mxu0 0.0
    %91 = vmatpush1.msra.mxu0 %v65
    %92 = vmatprep.subr.mxu0 0.0
    %93 = vmatpush1.msra.mxu0 %v66
    %94 = vmatprep.subr.mxu0 0.0
    %95 = vmatpush1.msra.mxu0 %v67
    %96 = vmatprep.subr.mxu0 0.0
    %97 = vmatpush1.msra.mxu0 %v68
    %98 = vmatprep.subr.mxu0 0.0
    %99 = vmatpush1.msra.mxu0 %v69
    %100 = vmatprep.subr.mxu0 0.0
    %101 = vmatpush1.msra.mxu0 %v70
    %102 = vmatprep.subr.mxu0 0.0
    %103 = vmatpush1.msra.mxu0 %v71
    %104 = vmatprep.subr.mxu0 0.0
    %105 = vmatpush1.msra.mxu0 0.0
    %106 = vmatprep.subr.mxu0 0.0
    %107 = vmatpush1.msra.mxu0 0.0
    %108 = vmatprep.subr.mxu0 0.0
    %109 = vmatpush1.msra.mxu0 0.0
    %110 = vmatprep.subr.mxu0 0.0
    %111 = vmatpush1.msra.mxu0 0.0
    %112 = vmatprep.subr.mxu0 0.0
    %113 = vmatpush1.msra.mxu0 0.0
    %114 = vmatprep.subr.mxu0 0.0
    %115 = vmatpush1.msra.mxu0 0.0
    %116 = vmatprep.subr.mxu0 0.0
    %117 = vmatpush1.msra.mxu0 0.0
    %118 = vmatprep.subr.mxu0 0.0
    %119 = vmatpush1.msra.mxu0 0.0
    %120 = vmatprep.subr.mxu0 0.0
    %121 = vmatpush1.msra.mxu0 0.0
    %122 = vmatprep.subr.mxu0 0.0
    %123 = vmatpush1.msra.mxu0 0.0
    %124 = vmatprep.subr.mxu0 0.0
    %125 = vmatpush1.msra.mxu0 0.0
    %126 = vmatprep.subr.mxu0 0.0
    %127 = vmatpush1.msra.mxu0 0.0
    %128 = vmatprep.subr.mxu0 0.0
    %129 = vmatpush1.msra.mxu0 0.0
    %130 = vmatprep.subr.mxu0 0.0
    %131 = vmatpush1.msra.mxu0 0.0
    %132 = vmatprep.subr.mxu0 0.0
    %133 = vmatpush1.msra.mxu0 0.0
    %134 = vmatprep.subr.mxu0 0.0
    %135 = vmatpush1.msra.mxu0 0.0
    %136 = vmatprep.mubr.f32.mxu0 0.0
    %137 = vmatmul.mubr.f32.gmra.mrb[0].mxu0 %v55
    %v138 = vpop.f32.mrb[0].mxu0
    %v139 = vadd.f32 0.0, %v138
    %v140 = vpop.f32.mrb[0].mxu0
    %141 = vdwg.mxu0
    %v142 = vtanh.pop %v139
    %v143 = vlaneseq
    %v144 = vshrl.u32 %v143, 7
    %v145 = vlaneseq
    %v146 = vand.u32 %v145, 127
    %vm147 = vcmp.eq.s32.totalorder %v144, 0
    %vm148 = vcmp.eq.s32.totalorder %v146, 48
    %vm149 = vmand %vm147, %vm148
    %v150 = vsel %vm149, 1.0, %v142
    %151 = vst [vmem:[#allocation2] sm:$0xff] %v150
    %152 = vst [vmem:[%s5] sm:$0xff] %v150
    %v153 = vld [vmem:[#allocation5] sm:$0xff]
    %v154 = vld [vmem:[#allocation5 + $0x8] sm:$0xff]
    %v155 = vld [vmem:[#allocation5 + $0x10] sm:$0xff]
    %v156 = vld [vmem:[#allocation5 + $0x18] sm:$0xff]
    %v157 = vld [vmem:[#allocation5 + $0x20] sm:$0xff]
    %v158 = vld [vmem:[#allocation5 + $0x28] sm:$0xff]
    %v159 = vld [vmem:[#allocation5 + $0x30] sm:$0xff]
    %v160 = vld [vmem:[#allocation5 + $0x38] sm:$0xff]
    %v161 = vld [vmem:[#allocation5 + $0x40] sm:$0xff]
    %v162 = vld [vmem:[#allocation5 + $0x48] sm:$0xff]
    %v163 = vld [vmem:[#allocation5 + $0x50] sm:$0xff]
    %v164 = vld [vmem:[#allocation5 + $0x58] sm:$0xff]
    %v165 = vld [vmem:[#allocation5 + $0x60] sm:$0xff]
    %v166 = vld [vmem:[#allocation5 + $0x68] sm:$0xff]
    %v167 = vld [vmem:[#allocation5 + $0x70] sm:$0xff]
    %v168 = vld [vmem:[#allocation5 + $0x78] sm:$0xff]
    %169 = vmatprep.subr.mxu0 0.0
    %170 = vmatpush1.msra.mxu0 %v153
    %171 = vmatprep.subr.mxu0 0.0
    %172 = vmatpush1.msra.mxu0 %v154
    %173 = vmatprep.subr.mxu0 0.0
    %174 = vmatpush1.msra.mxu0 %v155
    %175 = vmatprep.subr.mxu0 0.0
    %176 = vmatpush1.msra.mxu0 %v156
    %177 = vmatprep.subr.mxu0 0.0
    %178 = vmatpush1.msra.mxu0 %v157
    %179 = vmatprep.subr.mxu0 0.0
    %180 = vmatpush1.msra.mxu0 %v158
    %181 = vmatprep.subr.mxu0 0.0
    %182 = vmatpush1.msra.mxu0 %v159
    %183 = vmatprep.subr.mxu0 0.0
    %184 = vmatpush1.msra.mxu0 %v160
    %185 = vmatprep.subr.mxu0 0.0
    %186 = vmatpush1.msra.mxu0 %v161
    %187 = vmatprep.subr.mxu0 0.0
    %188 = vmatpush1.msra.mxu0 %v162
    %189 = vmatprep.subr.mxu0 0.0
    %190 = vmatpush1.msra.mxu0 %v163
    %191 = vmatprep.subr.mxu0 0.0
    %192 = vmatpush1.msra.mxu0 %v164
    %193 = vmatprep.subr.mxu0 0.0
    %194 = vmatpush1.msra.mxu0 %v165
    %195 = vmatprep.subr.mxu0 0.0
    %196 = vmatpush1.msra.mxu0 %v166
    %197 = vmatprep.subr.mxu0 0.0
    %198 = vmatpush1.msra.mxu0 %v167
    %199 = vmatprep.subr.mxu0 0.0
    %200 = vmatpush1.msra.mxu0 %v168
    %201 = vmatprep.subr.mxu0 0.0
    %202 = vmatpush1.msra.mxu0 0.0
    %203 = vmatprep.subr.mxu0 0.0
    %204 = vmatpush1.msra.mxu0 0.0
    %205 = vmatprep.subr.mxu0 0.0
    %206 = vmatpush1.msra.mxu0 0.0
    %207 = vmatprep.subr.mxu0 0.0
    %208 = vmatpush1.msra.mxu0 0.0
    %209 = vmatprep.subr.mxu0 0.0
    %210 = vmatpush1.msra.mxu0 0.0
    %211 = vmatprep.subr.mxu0 0.0
    %212 = vmatpush1.msra.mxu0 0.0
    %213 = vmatprep.subr.mxu0 0.0
    %214 = vmatpush1.msra.mxu0 0.0
    %215 = vmatprep.subr.mxu0 0.0
    %216 = vmatpush1.msra.mxu0 0.0
    %217 = vmatprep.subr.mxu0 0.0
    %218 = vmatpush1.msra.mxu0 0.0
    %219 = vmatprep.subr.mxu0 0.0
    %220 = vmatpush1.msra.mxu0 0.0
    %221 = vmatprep.subr.mxu0 0.0
    %222 = vmatpush1.msra.mxu0 0.0
    %223 = vmatprep.subr.mxu0 0.0
    %224 = vmatpush1.msra.mxu0 0.0
    %225 = vmatprep.subr.mxu0 0.0
    %226 = vmatpush1.msra.mxu0 0.0
    %227 = vmatprep.subr.mxu0 0.0
    %228 = vmatpush1.msra.mxu0 0.0
    %229 = vmatprep.subr.mxu0 0.0
    %230 = vmatpush1.msra.mxu0 0.0
    %231 = vmatprep.subr.mxu0 0.0
    %232 = vmatpush1.msra.mxu0 0.0
    %233 = vmatprep.mubr.f32.mxu0 0.0
    %234 = vmatmul.mubr.f32.gmra.mrb[0].mxu0 %v150
    %v235 = vpop.f32.mrb[0].mxu0
    %v236 = vadd.f32 0.0, %v235
    %v237 = vpop.f32.mrb[0].mxu0
    %238 = vdwg.mxu0
    %239 = vst [vmem:[%s4] sm:$0xff] %v236
    // Predicated region
    $region30: #{_forward_impl.1} parent=1 // pred_check
      _
    $region31: #{_forward_impl.1} parent=1 // pred_check_branch
      %241 = sbr.rel (0) target = $region33
    $region32: #{_forward_impl.1} parent=1 // pred_region
      _
    $region33: #{_forward_impl.1} parent=1 // pred_fallthru
      _
    // Predicated region
    $region34: #{_forward_impl.1} parent=1 // pred_check
      _
    $region35: #{_forward_impl.1} parent=1 // pred_check_branch
      %243 = sbr.rel (0) target = $region37
    $region36: #{_forward_impl.1} parent=1 // pred_region
      _
    $region37: #{_forward_impl.1} parent=1 // pred_fallthru
      _
    // Predicated region
    $region38: #{_forward_impl.1} parent=1 // pred_check
      _
    $region39: #{_forward_impl.1} parent=1 // pred_check_branch
      %245 = sbr.rel (0) target = $region41
    $region40: #{_forward_impl.1} parent=1 // pred_region
      _
    $region41: #{_forward_impl.1} parent=1 // pred_fallthru
      _
    // Predicated region
    $region42: #{_forward_impl.1} parent=1 // pred_check
      _
    $region43: #{_forward_impl.1} parent=1 // pred_check_branch
      %247 = sbr.rel (0) target = $region45
    $region44: #{_forward_impl.1} parent=1 // pred_region
      _
    $region45: #{_forward_impl.1} parent=1 // pred_fallthru
      _
    %248 = vsyncpa [#allocation4], 1
    %249 = vsyncpa [#allocation6], 1

</llo_original>
